<compile_context>
chip_gen: v7x
topology: tpu7x:2x2x1
jax: 0.10.0
libtpu: 0.0.40
codegen_flags: <defaults>
</compile_context>

<pallas_src>
import math

import jax
import jax.numpy as jnp
from jax.experimental import pallas as pl
from jax.experimental.pallas import tpu as pltpu

_LANE = 128
_SUBLANE = 8


def _cdiv(a: int, b: int) -> int:
    return -(-a // b)


def make_position_encoding_table(n_filters: int, max_len: int) -> jnp.ndarray:
    """Deterministic construction of the pe buffer (same math as PyTorch __init__)."""
    position = jnp.arange(0, max_len, dtype=jnp.float32)[:, None]            # (max_len, 1)
    div_term = jnp.exp(
        jnp.arange(0, n_filters, 2, dtype=jnp.float32)
        * (-(math.log(10000.0) / n_filters))
    )                                                                         # (n_filters//2,)
    angles = position * div_term                                              # (max_len, n_filters//2)
    pe = jnp.zeros((max_len, n_filters), dtype=jnp.float32)
    pe = pe.at[:, 0::2].set(jnp.sin(angles))
    pe = pe.at[:, 1::2].set(jnp.cos(angles))
    return pe


def _hw_params():
    """TPU-generation aware block-size targets, VMEM ceiling and TC count."""
    vmem_bytes = 128 << 20
    num_tc = 1
    try:
        info = pltpu.get_tpu_info()
        vmem_bytes = int(getattr(info, "vmem_capacity_bytes", vmem_bytes) or vmem_bytes)
        for attr in ("num_tensorcores", "tensorcore_count", "num_cores", "core_count"):
            v = getattr(info, attr, None)
            if isinstance(v, int) and v > 0:
                num_tc = v
                break
    except Exception:  # non-TPU / interpret-mode fallbacks
        pass
    if vmem_bytes <= (64 << 20):
        # v7x-class: 64 MiB VMEM per TC, 2 TCs per chip.
        num_tc = max(num_tc, 2)
        target_blk = 4 << 20
        max_blk = 8 << 20
        vmem_cap = min(int(0.8 * vmem_bytes), 52 << 20)
    else:
        # v5e / v6e: 128 MiB VMEM, single TC.
        target_blk = 8 << 20
        max_blk = 16 << 20
        vmem_cap = min(int(0.8 * vmem_bytes), 104 << 20)
    return target_blk, max_blk, vmem_cap, num_tc


def _compiler_params(x_block_bytes, pe_block_bytes, n_grid_axes, vmem_cap):
    # x-in and out blocks double-buffered, pe block double-buffered, + headroom.
    needed = 4 * x_block_bytes + 2 * pe_block_bytes + (8 << 20)
    vmem_limit = int(min(vmem_cap, max(32 << 20, needed)))
    return pltpu.CompilerParams(
        dimension_semantics=("parallel",) * n_grid_axes,
        vmem_limit_bytes=vmem_limit,
    )


def _add_pe_kernel(x_ref, pe_ref, o_ref):
    # Tile add with an in-kernel broadcast of the (1, ...) pe block.
    # pe is float32; the add runs in f32 and is cast only on the store.
    o_ref[...] = (x_ref[...].astype(jnp.float32) + pe_ref[...]).astype(o_ref.dtype)


def _pick_rows(total_rows, row_bytes, target_bytes, max_bytes, min_steps):
    """Block row count: a multiple of 8 (<= total) or the full extent, sized to
    ~target_bytes, capped at max_bytes, leaving >= min_steps grid steps when
    the extent allows it (so both v7x TensorCores get work)."""
    if total_rows < _SUBLANE:
        return total_rows                                  # tiny: full extent
    budget = min(target_bytes, max_bytes)
    full_bytes = total_rows * row_bytes
    if full_bytes <= budget and (min_steps <= 1 or total_rows < min_steps * _SUBLANE):
        return total_rows                                  # whole thing in one block
    rows = max(_SUBLANE, (budget // max(row_bytes, 1)) // _SUBLANE * _SUBLANE)
    if min_steps > 1 and total_rows >= min_steps * _SUBLANE:
        cap = max(_SUBLANE, (total_rows // min_steps) // _SUBLANE * _SUBLANE)
        rows = min(rows, cap)
    rows = min(rows, total_rows // _SUBLANE * _SUBLANE)
    if rows >= total_rows:
        rows = total_rows
    return rows


def position_encoding_forward(
    x: jnp.ndarray,
    pe: jnp.ndarray,
    *,
    target_block_bytes: int | None = None,
    max_block_bytes: int | None = None,
) -> jnp.ndarray:
    """
    Equivalent of PositionEncoding.forward: out = x + pe[:L] broadcast over
    all leading dims.  x: (*, L, D), pe: (max_len, D).
    """
    orig_shape = x.shape
    assert x.ndim >= 2, "input must be at least rank 2 (*, L, D)"
    L, D = int(orig_shape[-2]), int(orig_shape[-1])
    assert pe.shape[-1] == D and pe.shape[0] >= L

    B = int(math.prod(orig_shape[:-2])) if len(orig_shape) > 2 else 1
    dtype = x.dtype
    itemsize = jnp.dtype(dtype).itemsize

    target_blk, max_blk, vmem_cap, num_tc = _hw_params()
    if target_block_bytes is not None:
        target_blk = int(target_block_bytes)
    if max_block_bytes is not None:
        max_blk = int(max_block_bytes)
    max_blk = max(max_blk, target_blk)

    # Keep the table in float32 (matches the PyTorch fp32 pe buffer exactly).
    pe_l = pe[:L, :].astype(jnp.float32)

    # ---------- Path 1: lane-flatten (narrow D, e.g. the module's D=32 case) ----
    # Flatten (L, D) onto the lane axis so stores are full-width vst instead of
    # masked vst.msk.  pe travels as a single (1, C) f32 block (constant block
    # index -> DMA'd once) and is broadcast along sublanes in-kernel; it is never
    # materialized at x-size in HBM.
    if D % _LANE != 0 and (L * D) % _LANE == 0:
        C = L * D
        row_bytes = C * itemsize
        if _SUBLANE * row_bytes <= max_blk:
            tb = _pick_rows(B, row_bytes, target_blk, max_blk, num_tc)
            x2 = x.reshape(B, C)
            pe_flat = pe_l.reshape(1, C)
            out = pl.pallas_call(
                _add_pe_kernel,
                out_shape=jax.ShapeDtypeStruct((B, C), dtype),
                grid_spec=pltpu.PrefetchScalarGridSpec(
                    num_scalar_prefetch=0,
                    grid=(_cdiv(B, tb),),
                    in_specs=[
                        pl.BlockSpec((tb, C), lambda i: (i, 0)),
                        pl.BlockSpec((1, C), lambda i: (0, 0)),
                    ],
                    out_specs=pl.BlockSpec((tb, C), lambda i: (i, 0)),
                ),
                compiler_params=_compiler_params(tb * row_bytes, C * 4, 1, vmem_cap),
                input_output_aliases={0: 0},
            )(x2, pe_flat)
            return out.reshape(orig_shape)

    # ---------- Path 2: unified (B, L, D) sequence path -------------------------
    # Blocks are (k, tr, D) with D the full last dim.  Small-L / large-B inputs
    # pack k whole sequences per block (tr = L); long sequences tile along L
    # with a multiple-of-8 tr (partial edge blocks handled by Pallas).  pe is a
    # (1, tr, D) f32 block whose index is constant along the inner (batch) grid
    # axis, so it is DMA'd only ceil(L/tr) times in total, and is broadcast
    # along the k axis in-kernel.
    x3 = x.reshape(B, L, D)
    pe3 = pe_l.reshape(1, L, D)
    row_bytes = D * itemsize
    seq_bytes = L * row_bytes

    if seq_bytes <= target_blk:
        # Pack k whole sequences per block (~target_block_bytes).
        tr = L
        k = max(1, min(B, target_blk // max(seq_bytes, 1), max_blk // max(seq_bytes, 1)))
        # Megacore / v7x: keep >= num_tc total grid steps when the batch allows.
        if num_tc > 1 and _cdiv(B, k) < num_tc and B >= num_tc:
            k = max(1, B // num_tc)
    else:
        # A single sequence already exceeds the target block: tile along L.
        k = 1
        tr = _pick_rows(L, row_bytes, target_blk, max_blk, 1)

    n_l = _cdiv(L, tr)
    n_b = _cdiv(B, k)

    out = pl.pallas_call(
        _add_pe_kernel,
        out_shape=jax.ShapeDtypeStruct((B, L, D), dtype),
        grid_spec=pltpu.PrefetchScalarGridSpec(
            num_scalar_prefetch=0,
            # Outer axis i: tile position along the sequence (selects the pe
            # block).  Inner (fastest) axis j: batch block.  pe's block index is
            # constant along the inner loop -> fetched only n_l times total.
            grid=(n_l, n_b),
            in_specs=[
                pl.BlockSpec((k, tr, D), lambda i, j: (j, i, 0)),
                pl.BlockSpec((1, tr, D), lambda i, j: (0, i, 0)),
            ],
            out_specs=pl.BlockSpec((k, tr, D), lambda i, j: (j, i, 0)),
        ),
        compiler_params=_compiler_params(k * tr * row_bytes, tr * D * 4, 2, vmem_cap),
        input_output_aliases={0: 0},
    )(x3, pe3)
    return out.reshape(orig_shape)


if __name__ == "__main__":
    key = jax.random.PRNGKey(0)
    k1, k2, k3, k4, k5, k6 = jax.random.split(key, 6)

    # ---- Demo shapes matching the PyTorch module (narrow D -> lane-flatten path)
    n_filters = 32   # hidden size D
    max_len = 16     # maximum sequence length
    L = 8            # actual sequence length
    batch = 2
    pe = make_position_encoding_table(n_filters, max_len)

    # 3-D input: (B, L, D)
    x3 = jax.random.normal(k1, (batch, L, n_filters), dtype=jnp.float32)
    out3 = position_encoding_forward(x3, pe)
    jax.block_until_ready(out3)
    ref3 = x3 + pe[:L, :][None, :, :]
    assert out3.shape == x3.shape
    assert jnp.allclose(out3, ref3, atol=1e-6), "3D mismatch"

    # 4-D input: (B, N, L, D) — broadcast over extra leading dims
    x4 = jax.random.normal(k2, (batch, 3, L, n_filters), dtype=jnp.float32)
    out4 = position_encoding_forward(x4, pe)
    jax.block_until_ready(out4)
    ref4 = x4 + pe[:L, :][None, None, :, :]
    assert out4.shape == x4.shape
    assert jnp.allclose(out4, ref4, atol=1e-6), "4D mismatch"

    # ---- Lane-dense D, forced tiny block budget -> tr < L, 2-axis grid
    D2, L2 = 128, 32
    pe2 = make_position_encoding_table(D2, 64)
    x5 = jax.random.normal(k3, (2, L2, D2), dtype=jnp.float32)
    out5 = position_encoding_forward(x5, pe2, target_block_bytes=8 * 1024,
                                     max_block_bytes=8 * 1024)
    jax.block_until_ready(out5)
    ref5 = x5 + pe2[:L2, :][None, :, :]
    assert jnp.allclose(out5, ref5, atol=1e-6), "seq-tiled mismatch"

    # ---- Small-L / larger-B: packs multiple whole sequences per block
    x6 = jax.random.normal(k4, (64, 8, D2), dtype=jnp.float32)
    out6 = position_encoding_forward(x6, pe2, target_block_bytes=64 * 1024)
    jax.block_until_ready(out6)
    ref6 = x6 + pe2[:8, :][None, :, :]
    assert jnp.allclose(out6, ref6, atol=1e-6), "seq-pack mismatch"

    # ---- Odd L (not a multiple of 8) with tr < L -> partial edge blocks
    L7 = 10
    x7 = jax.random.normal(k5, (2, L7, D2), dtype=jnp.float32)
    out7 = position_encoding_forward(x7, pe2, target_block_bytes=4 * 1024,
                                     max_block_bytes=4 * 1024)
    jax.block_until_ready(out7)
    ref7 = x7 + pe2[:L7, :][None, :, :]
    assert jnp.allclose(out7, ref7, atol=1e-6), "odd-L mismatch"

    # ---- bf16 input: pe stays f32, add in f32, cast only on the store
    x8 = jax.random.normal(k6, (2, 16, D2), dtype=jnp.bfloat16)
    out8 = position_encoding_forward(x8, pe2)
    jax.block_until_ready(out8)
    ref8 = x8.astype(jnp.float32) + pe2[:16, :][None, :, :]
    assert jnp.allclose(out8.astype(jnp.float32), ref8, atol=5e-2), "bf16 mismatch"

    print("KERNEL_OK")
</pallas_src>

<mosaic_0001>
module attributes {stable_mosaic.version = 11 : i64} {
  func.func @_add_pe_kernel(%arg0: i32, %arg1: memref<2x256xf32, #tpu.memory_space<vmem>>, %arg2: memref<1x256xf32, #tpu.memory_space<vmem>>, %arg3: memref<2x256xf32, #tpu.memory_space<vmem>>) attributes {dimension_semantics = [#tpu.dimension_semantics<parallel>], iteration_bounds = array<i64: 1>, scalar_prefetch = 0 : i64, scratch_operands = 0 : i64, tpu.core_type = #tpu.core_type<tc>, window_params = [{transform_indices = @transform_0, window_bounds = array<i64: 2, 256>}, {pipeline_mode = #tpu.pipeline_mode<synchronous>, transform_indices = @transform_1, window_bounds = array<i64: 1, 256>}, {transform_indices = @transform_2, window_bounds = array<i64: 2, 256>}]} {
    %c0 = arith.constant 0 : index
    %c0_0 = arith.constant 0 : index
    %0 = vector.load %arg1[%c0, %c0_0] : memref<2x256xf32, #tpu.memory_space<vmem>>, vector<2x256xf32>
    %c0_1 = arith.constant 0 : index
    %c0_2 = arith.constant 0 : index
    %1 = vector.load %arg2[%c0_1, %c0_2] : memref<1x256xf32, #tpu.memory_space<vmem>>, vector<1x256xf32>
    %2 = vector.broadcast %1 : vector<1x256xf32> to vector<2x256xf32>
    %3 = arith.addf %0, %2 : vector<2x256xf32>
    %c0_3 = arith.constant 0 : index
    %c0_4 = arith.constant 0 : index
    %4 = vector.load %arg3[%c0_3, %c0_4] : memref<2x256xf32, #tpu.memory_space<vmem>>, vector<2x256xf32>
    tpu.vector_store %arg3[%c0_3, %c0_4], %3 {strides = array<i32>} : memref<2x256xf32, #tpu.memory_space<vmem>>, vector<2x256xf32>,
    return
  }
  func.func @transform_0(%arg0: i32) -> (i32, i32) {
    %c0_i32 = arith.constant 0 : i32
    %c0_i32_0 = arith.constant 0 : i32
    return %arg0, %c0_i32 : i32, i32
  }
  func.func @transform_1(%arg0: i32) -> (i32, i32) {
    %c0_i32 = arith.constant 0 : i32
    %c0_i32_0 = arith.constant 0 : i32
    %c0_i32_1 = arith.constant 0 : i32
    return %c0_i32, %c0_i32_0 : i32, i32
  }
  func.func @transform_2(%arg0: i32) -> (i32, i32) {
    %c0_i32 = arith.constant 0 : i32
    %c0_i32_0 = arith.constant 0 : i32
    return %arg0, %c0_i32 : i32, i32
  }
}

</mosaic_0001>

<llo_original>
// kernel: tpu_custom_call.1
$region0: #{tpu_custom_call.1}
  #allocation0 [shape = 'u32[]', space=smem, size = 0x4, offset = 0x4, fixed_abs, tag = 'smem constant byte address 0x4 - core index']
  #allocation1 [shape = 'u32[144,128]{1,0:T(1,128)}', space=vmem, size = 0x12000, scoped, tag = 'internal scratch']
  %s0 = inlined_call_operand.hbm [shape: f32[2,256], index: 0, kind: input, shape index: {}, may-alias: {0,2}]
  %s1 = inlined_call_operand.vmem [shape: f32[1,256], index: 1, kind: input, shape index: {}]
  %s2 = inlined_call_operand.hbm [shape: f32[2,256], index: 2, kind: output, shape index: {}, may-alias: {0,2}]
  %s3 = sld [smem:[#allocation0]]
  $region22: #{tpu_custom_call.1} parent=0
    _
  %s5 = ssub.s32 1, %s3
  %s6 = scalar_select 0, %s5, %s3
  $region1: #{tpu_custom_call.1} parent=0
    #allocation2 [shape = 'u8[2048]{0}', space=vmem, size = 0x800, scoped, tag = 'input window, operand 0, single buffered']
    #allocation3 [shape = 's32[1]{0}', space=sflag, size = 0x4, scoped, tag = 'scoped memory for tpu_custom_call.1']
    #allocation4 [shape = 's32[1]{0}', space=sflag, size = 0x4, scoped, tag = 'scoped memory for tpu_custom_call.1']
    #allocation5 [shape = 'u8[2048]{0}', space=vmem, size = 0x800, scoped, tag = 'output window, operand 0, single buffered']
    %7 = vsyncpa [#allocation3], 0
    %8 = vsyncpa [#allocation4], 0
    // Predicated region
    $region2: #{tpu_custom_call.1} parent=1 // pred_check
      _
    $region3: #{tpu_custom_call.1} parent=1 // pred_check_branch
      %10 = sbr.rel (0) target = $region5
    $region4: #{tpu_custom_call.1} parent=1 // pred_region
      %s12 = ssub.s32 64, 64
      %13 = vsyncadd [#allocation3], %s12
      %s15 = sshll.u32 [#allocation2], 4
      %s16 = int_to_ptr.vmem [resolvable:$true] %s15
      %18 = dma.hbm_to_vmem [thread:$0]  %s0, 64, %s16, [#allocation3]
    $region5: #{tpu_custom_call.1} parent=1 // pred_fallthru
      _
    // Predicated region
    $region6: #{tpu_custom_call.1} parent=1 // pred_check
      _
    $region7: #{tpu_custom_call.1} parent=1 // pred_check_branch
      %20 = sbr.rel (0) target = $region9
    $region8: #{tpu_custom_call.1} parent=1 // pred_region
      _
    $region9: #{tpu_custom_call.1} parent=1 // pred_fallthru
      _
    // Predicated region
    $region10: #{tpu_custom_call.1} parent=1 // pred_check
      _
    $region11: #{tpu_custom_call.1} parent=1 // pred_check_branch
      %22 = sbr.rel (0) target = $region13
    $region12: #{tpu_custom_call.1} parent=1 // pred_region
      %23 = dma.done [#allocation3], 64
    $region13: #{tpu_custom_call.1} parent=1 // pred_fallthru
      _
    %v24 = vld [vmem:[#allocation2] sm:$0xf]
    %v25 = vld [vmem:[%s1] sm:$0x3]
    %v27 = vlaneseq
    %v28 = vshrl.u32 %v27, 7
    %v29 = vsub.s32 0, %v28
    %v30 = vrot.slane %v25, %v29
    %v31 = vlaneseq
    %v32 = vshrl.u32 %v31, 7
    %v33 = vsub.s32 1, %v32
    %v34 = vrot.slane %v25, %v33
    %v35 = vcombine.low %v30, %v34
    %v37 = vunpack.c.l.s4 1983009808
    %v38 = vunpack.c.0.s8 %v37
    %v39 = vlaneseq
    %v40 = vshrl.u32 %v39, 7
    %v41 = vsub.s32 %v38, %v40
    %v42 = vrot.slane %v35, %v41
    %v44 = vadd.f32 %v24, %v42
    %45 = vst [vmem:[#allocation5] sm:$0xf] %v44
    // Predicated region
    $region14: #{tpu_custom_call.1} parent=1 // pred_check
      _
    $region15: #{tpu_custom_call.1} parent=1 // pred_check_branch
      %47 = sbr.rel (0) target = $region17
    $region16: #{tpu_custom_call.1} parent=1 // pred_region
      %s49 = ssub.s32 64, 64
      %50 = vsyncadd [#allocation4], %s49
      %s52 = sshll.u32 [#allocation5], 4
      %s53 = int_to_ptr.vmem [resolvable:$true] %s52
      %55 = dma.vmem_to_hbm [thread:$0]  %s53, 64, %s2, [#allocation4]
    $region17: #{tpu_custom_call.1} parent=1 // pred_fallthru
      _
    // Predicated region
    $region18: #{tpu_custom_call.1} parent=1 // pred_check
      _
    $region19: #{tpu_custom_call.1} parent=1 // pred_check_branch
      %57 = sbr.rel (0) target = $region21
    $region20: #{tpu_custom_call.1} parent=1 // pred_region
      %58 = dma.done [#allocation4], 64
    $region21: #{tpu_custom_call.1} parent=1 // pred_fallthru
      _
    %59 = vsyncpa [#allocation3], 1
    %60 = vsyncpa [#allocation4], 1

</llo_original>
